<compile_context>
chip_gen: v7x
topology: tpu7x:2x2x1
jax: 0.10.0
libtpu: 0.0.40
codegen_flags: <defaults>
</compile_context>

<pallas_src>
import functools

import jax
import jax.numpy as jnp
from jax import lax
from jax.experimental import pallas as pl
from jax.experimental.pallas import tpu as pltpu


def _round_up(n, m):
    return ((n + m - 1) // m) * m


def _fused_conv_gmp_kernel(x_ref, w_ref, b_ref, o_ref, *, batch, hw):
    """Single grid step over ALL batch elements (v5e/v6e default path).

    x_ref: (B*H*W, K_pad)    im2col patches, contraction zero-padded to 128
    w_ref: (K_pad, Cout_pad) flattened conv taps (zero rows in the K pad)
    b_ref: (1, Cout_pad)     bias (zero in padded lanes)
    o_ref: (B, Cout_pad)     globally max-pooled, biased, ReLU'd features
    """
    # One MXU pass over the whole problem: (B*H*W, K_pad) @ (K_pad, Cout_pad).
    acc = jnp.dot(x_ref[...], w_ref[...], preferred_element_type=jnp.float32)
    # Per-batch segmented global max (adaptive_max_pool2d to (1,1)); bias and
    # ReLU applied AFTER the max (exact: bias is per-channel constant along
    # the reduced axis and ReLU is monotone), so only B rows hit the VPU.
    for b in range(batch):
        m = jnp.max(acc[b * hw:(b + 1) * hw, :], axis=0, keepdims=True)
        o_ref[b:b + 1, :] = jnp.maximum(m + b_ref[...], 0.0)


def _batched_conv_gmp_kernel(x_ref, w_ref, b_ref, o_ref):
    """grid=(B,) variant: one batch element per step (v7x 2-TC parallelism).

    x_ref: (H*W, K_pad), w_ref: (K_pad, Cout_pad), b_ref: (1, Cout_pad),
    o_ref: (1, 1, Cout_pad)
    """
    acc = jnp.dot(x_ref[...], w_ref[...], preferred_element_type=jnp.float32)
    m = jnp.max(acc, axis=0, keepdims=True)
    o_ref[...] = jnp.maximum(m + b_ref[...], 0.0)[None]


class EarlyFusionPallas:
    """JAX/Pallas re-implementation of EarlyFusion.forward."""

    def __init__(self, lidar_channels, rgb_channels, proto_w, proto_b,
                 mxu_dtype=jnp.float32, batch_parallel=False):
        assert rgb_channels <= proto_w.shape[1], (
            "EarlyFusion copies proto weights into the first rgb_channels "
            "slices; rgb_channels must not exceed the prototype in_channels."
        )
        self.lidar_channels = lidar_channels
        self.rgb_channels = rgb_channels
        self.mxu_dtype = mxu_dtype
        self.batch_parallel = batch_parallel

        cout = proto_w.shape[0]
        self.cout = cout
        self.cout_pad = _round_up(cout, 128)

        # _change_num_channels: all in-channel slices <- mean over in-channels,
        # then the first rgb_channels slices are restored from the prototype.
        # Every LiDAR slice carries the identical mean weight, so the LiDAR
        # part of the conv factors through a channel-sum of the input, and the
        # effective weight is [proto rgb slice | mean_w] with Cin_eff = rgb+1.
        proto_w = proto_w.astype(jnp.float32)
        mean_w = proto_w.mean(axis=1, keepdims=True)              # (Cout,1,3,3)
        w_eff = jnp.concatenate([proto_w[:, :rgb_channels], mean_w], axis=1)
        self.cin_eff = rgb_channels + 1
        self.k = 9 * self.cin_eff
        self.k_pad = _round_up(self.k, 128)      # lane-dense contraction dim

        # OIHW -> (kh, kw, Cin_eff, Cout) -> (9*Cin_eff, Cout);
        # zero-pad K to 128 rows and lane-pad Cout to 128 columns.
        w_flat = jnp.transpose(w_eff, (2, 3, 1, 0)).reshape(self.k, cout)
        self.w_flat = jnp.pad(
            w_flat,
            ((0, self.k_pad - self.k), (0, self.cout_pad - cout)),
        ).astype(mxu_dtype)
        self.b_pad = jnp.pad(
            proto_b.astype(jnp.float32), (0, self.cout_pad - cout)
        ).reshape(1, self.cout_pad)

    def _im2col(self, x, B, H, W):
        # Pre-reduce the LiDAR slice to one channel (identical mean weights).
        rgb = x[:, : self.rgb_channels]
        lidar_sum = x[:, self.rgb_channels:].sum(axis=1, keepdims=True)
        x_eff = jnp.concatenate([rgb, lidar_sum], axis=1)   # (B, Cin_eff, H, W)

        # NCHW -> NHWC, spatial pad=1 halo, im2col.  Tap order kh*3 + kw,
        # channel minor — matches the flat weight layout above.
        x_nhwc = jnp.transpose(x_eff, (0, 2, 3, 1))
        x_pad = jnp.pad(x_nhwc, ((0, 0), (1, 1), (1, 1), (0, 0)))
        cols = [x_pad[:, kh:kh + H, kw:kw + W, :]
                for kh in range(3) for kw in range(3)]
        patches = jnp.stack(cols, axis=3).reshape(B * H * W, self.k)
        # Zero-pad the contraction dim to 128 lanes (unmasked, lane-dense).
        patches = jnp.pad(patches, ((0, 0), (0, self.k_pad - self.k)))
        return patches.astype(self.mxu_dtype)

    def __call__(self, x):
        B, _, H, W = x.shape
        x = x.astype(jnp.float32)
        patches = self._im2col(x, B, H, W)

        if self.batch_parallel:
            # v7x: one batch element per grid step, one step per TensorCore.
            out = pl.pallas_call(
                _batched_conv_gmp_kernel,
                out_shape=jax.ShapeDtypeStruct((B, 1, self.cout_pad),
                                               jnp.float32),
                grid_spec=pltpu.PrefetchScalarGridSpec(
                    num_scalar_prefetch=0,
                    grid=(B,),
                    in_specs=[
                        pl.BlockSpec((H * W, self.k_pad), lambda b: (b, 0)),
                        pl.BlockSpec((self.k_pad, self.cout_pad),
                                     lambda b: (0, 0)),
                        pl.BlockSpec((1, self.cout_pad), lambda b: (0, 0)),
                    ],
                    out_specs=pl.BlockSpec((1, 1, self.cout_pad),
                                           lambda b: (b, 0, 0)),
                ),
                compiler_params=pltpu.CompilerParams(
                    dimension_semantics=("parallel",),
                ),
            )(patches, self.w_flat, self.b_pad)
            pooled = out[:, 0, : self.cout]
        else:
            # v5e/v6e (single TC) default: one step over the whole problem —
            # one M=B*H*W MXU pass, weights/bias DMA'd once, no per-step
            # pipeline overhead, in-kernel per-batch segmented max.
            out = pl.pallas_call(
                functools.partial(_fused_conv_gmp_kernel, batch=B, hw=H * W),
                out_shape=jax.ShapeDtypeStruct((B, self.cout_pad),
                                               jnp.float32),
                grid_spec=pltpu.PrefetchScalarGridSpec(
                    num_scalar_prefetch=0,
                    grid=(1,),
                    in_specs=[
                        pl.BlockSpec((B * H * W, self.k_pad),
                                     lambda i: (0, 0)),
                        pl.BlockSpec((self.k_pad, self.cout_pad),
                                     lambda i: (0, 0)),
                        pl.BlockSpec((1, self.cout_pad), lambda i: (0, 0)),
                    ],
                    out_specs=pl.BlockSpec((B, self.cout_pad),
                                           lambda i: (0, 0)),
                ),
                compiler_params=pltpu.CompilerParams(
                    dimension_semantics=("arbitrary",),
                ),
            )(patches, self.w_flat, self.b_pad)
            pooled = out[:, : self.cout]

        # adaptive_max_pool2d((1,1)) output layout: (B, Cout, 1, 1)
        return pooled.reshape(B, self.cout, 1, 1)


def _reference(x, lidar_channels, rgb_channels, proto_w, proto_b):
    """Pure-JAX reference of EarlyFusion.forward (full un-reduced weights)."""
    cout = proto_w.shape[0]
    proto_w = proto_w.astype(jnp.float32)
    mean_w = proto_w.mean(axis=1, keepdims=True)
    w_full = jnp.concatenate(
        [proto_w[:, :rgb_channels],
         jnp.broadcast_to(mean_w, (cout, lidar_channels, 3, 3))],
        axis=1,
    )
    out = lax.conv_general_dilated(
        x.astype(jnp.float32), w_full,
        window_strides=(1, 1), padding=((1, 1), (1, 1)),
        dimension_numbers=("NCHW", "OIHW", "NCHW"),
    )
    out = jnp.maximum(out + proto_b.astype(jnp.float32)[None, :, None, None],
                      0.0)
    return jnp.max(out, axis=(2, 3), keepdims=True)     # (B, Cout, 1, 1)


if __name__ == "__main__":
    B, RGB_C, LIDAR_C, H, W, COUT = 2, 3, 4, 16, 16, 32

    key = jax.random.PRNGKey(0)
    k_x, k_w, k_b = jax.random.split(key, 3)

    # Deterministic "prototype" first-conv parameters (Conv2d(3, COUT, 3, pad=1))
    proto_w = 0.1 * jax.random.normal(k_w, (COUT, 3, 3, 3), dtype=jnp.float32)
    proto_b = 0.1 * jax.random.normal(k_b, (COUT,), dtype=jnp.float32)

    x = jax.random.normal(k_x, (B, RGB_C + LIDAR_C, H, W), dtype=jnp.float32)
    ref = _reference(x, LIDAR_C, RGB_C, proto_w, proto_b)

    # Default path: single-step collapsed grid (best on single-TC v5e/v6e).
    model = EarlyFusionPallas(LIDAR_C, RGB_C, proto_w, proto_b)
    pooled = jax.block_until_ready(model(x))
    if pooled.shape != ref.shape:
        raise AssertionError(f"shape mismatch {pooled.shape} vs {ref.shape}")
    if not jnp.allclose(pooled, ref, rtol=1e-3, atol=1e-3):
        raise AssertionError("Pallas (collapsed) output mismatch vs reference")

    # v7x path: grid=(B,) marked "parallel" (one batch element per TensorCore).
    model_p = EarlyFusionPallas(LIDAR_C, RGB_C, proto_w, proto_b,
                                batch_parallel=True)
    pooled_p = jax.block_until_ready(model_p(x))
    if pooled_p.shape != ref.shape:
        raise AssertionError(f"shape mismatch {pooled_p.shape} vs {ref.shape}")
    if not jnp.allclose(pooled_p, ref, rtol=1e-3, atol=1e-3):
        raise AssertionError("Pallas (batch-parallel) output mismatch vs reference")

    print("KERNEL_OK")
</pallas_src>

<mosaic_0001>
module attributes {stable_mosaic.version = 11 : i64} {
  func.func @_fused_conv_gmp_kernel(%arg0: i32, %arg1: memref<512x128xf32, #tpu.memory_space<vmem>>, %arg2: memref<128x128xf32, #tpu.memory_space<vmem>>, %arg3: memref<1x128xf32, #tpu.memory_space<vmem>>, %arg4: memref<2x128xf32, #tpu.memory_space<vmem>>) attributes {dimension_semantics = [#tpu.dimension_semantics<arbitrary>], iteration_bounds = array<i64: 1>, scalar_prefetch = 0 : i64, scratch_operands = 0 : i64, tpu.core_type = #tpu.core_type<tc>, window_params = [{pipeline_mode = #tpu.pipeline_mode<synchronous>, transform_indices = @transform_0, window_bounds = array<i64: 512, 128>}, {pipeline_mode = #tpu.pipeline_mode<synchronous>, transform_indices = @transform_1, window_bounds = array<i64: 128, 128>}, {pipeline_mode = #tpu.pipeline_mode<synchronous>, transform_indices = @transform_2, window_bounds = array<i64: 1, 128>}, {pipeline_mode = #tpu.pipeline_mode<synchronous>, transform_indices = @transform_3, window_bounds = array<i64: 2, 128>}]} {
    %c0 = arith.constant 0 : index
    %c0_0 = arith.constant 0 : index
    %0 = vector.load %arg1[%c0, %c0_0] : memref<512x128xf32, #tpu.memory_space<vmem>>, vector<512x128xf32>
    %c0_1 = arith.constant 0 : index
    %c0_2 = arith.constant 0 : index
    %1 = vector.load %arg2[%c0_1, %c0_2] : memref<128x128xf32, #tpu.memory_space<vmem>>, vector<128x128xf32>
    %cst = arith.constant dense<0.000000e+00> : vector<512x128xf32>
    %2 = tpu.matmul %0, %1, %cst {dimension_numbers = #tpu.dot_dimension_numbers<[1], [0], [0], [1], [0, 0, 1, 1], [], []>} : vector<512x128xf32>, vector<128x128xf32>, vector<512x128xf32> -> vector<512x128xf32>
    %3 = vector.extract_strided_slice %2 {offsets = [0, 0], sizes = [256, 128], strides = [1, 1]} : vector<512x128xf32> to vector<256x128xf32>
    %cst_3 = arith.constant dense<0xFF800000> : vector<128xf32>
    %4 = vector.multi_reduction <maximumf>, %3, %cst_3 [0] : vector<256x128xf32> to vector<128xf32>
    %5 = vector.shape_cast %4 : vector<128xf32> to vector<1x128xf32>
    %c0_4 = arith.constant 0 : index
    %c0_5 = arith.constant 0 : index
    %6 = vector.load %arg3[%c0_4, %c0_5] : memref<1x128xf32, #tpu.memory_space<vmem>>, vector<1x128xf32>
    %7 = arith.addf %5, %6 : vector<1x128xf32>
    %cst_6 = arith.constant 0.000000e+00 : f32
    %8 = vector.broadcast %cst_6 : f32 to vector<1x128xf32>
    %9 = arith.maximumf %7, %8 : vector<1x128xf32>
    %c0_7 = arith.constant 0 : index
    %c0_8 = arith.constant 0 : index
    %10 = vector.load %arg4[%c0_7, %c0_8] : memref<2x128xf32, #tpu.memory_space<vmem>>, vector<1x128xf32>
    tpu.vector_store %arg4[%c0_7, %c0_8], %9 {strides = array<i32>} : memref<2x128xf32, #tpu.memory_space<vmem>>, vector<1x128xf32>,
    %11 = vector.extract_strided_slice %2 {offsets = [256, 0], sizes = [256, 128], strides = [1, 1]} : vector<512x128xf32> to vector<256x128xf32>
    %cst_9 = arith.constant dense<0xFF800000> : vector<128xf32>
    %12 = vector.multi_reduction <maximumf>, %11, %cst_9 [0] : vector<256x128xf32> to vector<128xf32>
    %13 = vector.shape_cast %12 : vector<128xf32> to vector<1x128xf32>
    %c0_10 = arith.constant 0 : index
    %c0_11 = arith.constant 0 : index
    %14 = vector.load %arg3[%c0_10, %c0_11] : memref<1x128xf32, #tpu.memory_space<vmem>>, vector<1x128xf32>
    %15 = arith.addf %13, %14 : vector<1x128xf32>
    %cst_12 = arith.constant 0.000000e+00 : f32
    %16 = vector.broadcast %cst_12 : f32 to vector<1x128xf32>
    %17 = arith.maximumf %15, %16 : vector<1x128xf32>
    %c1 = arith.constant 1 : index
    %c0_13 = arith.constant 0 : index
    %18 = vector.load %arg4[%c1, %c0_13] : memref<2x128xf32, #tpu.memory_space<vmem>>, vector<1x128xf32>
    tpu.vector_store %arg4[%c1, %c0_13], %17 {strides = array<i32>} : memref<2x128xf32, #tpu.memory_space<vmem>>, vector<1x128xf32>,
    return
  }
  func.func @transform_0(%arg0: i32) -> (i32, i32) {
    %c0_i32 = arith.constant 0 : i32
    %c0_i32_0 = arith.constant 0 : i32
    %c0_i32_1 = arith.constant 0 : i32
    return %c0_i32, %c0_i32_0 : i32, i32
  }
  func.func @transform_1(%arg0: i32) -> (i32, i32) {
    %c0_i32 = arith.constant 0 : i32
    %c0_i32_0 = arith.constant 0 : i32
    %c0_i32_1 = arith.constant 0 : i32
    return %c0_i32, %c0_i32_0 : i32, i32
  }
  func.func @transform_2(%arg0: i32) -> (i32, i32) {
    %c0_i32 = arith.constant 0 : i32
    %c0_i32_0 = arith.constant 0 : i32
    %c0_i32_1 = arith.constant 0 : i32
    return %c0_i32, %c0_i32_0 : i32, i32
  }
  func.func @transform_3(%arg0: i32) -> (i32, i32) {
    %c0_i32 = arith.constant 0 : i32
    %c0_i32_0 = arith.constant 0 : i32
    %c0_i32_1 = arith.constant 0 : i32
    return %c0_i32, %c0_i32_0 : i32, i32
  }
}

</mosaic_0001>

<llo_original>
// kernel: tpu_custom_call.1
$region0: #{tpu_custom_call.1}
  #allocation0 [shape = 'u32[]', space=smem, size = 0x4, offset = 0x4, fixed_abs, tag = 'smem constant byte address 0x4 - core index']
  #allocation1 [shape = 'u32[144,128]{1,0:T(1,128)}', space=vmem, size = 0x12000, scoped, tag = 'internal scratch']
  %s0 = inlined_call_operand.hbm [shape: f32[512,128], index: 0, kind: input, shape index: {}]
  %s1 = inlined_call_operand.hbm [shape: f32[128,128], index: 1, kind: input, shape index: {}]
  %s2 = inlined_call_operand.vmem [shape: f32[1,128], index: 2, kind: input, shape index: {}]
  %s3 = inlined_call_operand.hbm [shape: f32[2,128], index: 3, kind: output, shape index: {}]
  %s4 = sld [smem:[#allocation0]]
  $region30: #{tpu_custom_call.1} parent=0
    _
  %s6 = ssub.s32 1, %s4
  %s7 = scalar_select 0, %s6, %s4
  $region1: #{tpu_custom_call.1} parent=0
    #allocation2 [shape = 'u8[262144]{0}', space=vmem, size = 0x40000, scoped, tag = 'input window, operand 0, single buffered']
    #allocation3 [shape = 's32[1]{0}', space=sflag, size = 0x4, scoped, tag = 'scoped memory for tpu_custom_call.1']
    #allocation4 [shape = 's32[1]{0}', space=sflag, size = 0x4, scoped, tag = 'scoped memory for tpu_custom_call.1']
    #allocation5 [shape = 'u8[65536]{0}', space=vmem, size = 0x10000, scoped, tag = 'input window, operand 1, single buffered']
    #allocation6 [shape = 's32[1]{0}', space=sflag, size = 0x4, scoped, tag = 'scoped memory for tpu_custom_call.1']
    #allocation7 [shape = 'u8[1024]{0}', space=vmem, size = 0x400, scoped, tag = 'output window, operand 0, single buffered']
    %8 = vsyncpa [#allocation3], 0
    %9 = vsyncpa [#allocation6], 0
    %10 = vsyncpa [#allocation4], 0
    // Predicated region
    $region2: #{tpu_custom_call.1} parent=1 // pred_check
      _
    $region3: #{tpu_custom_call.1} parent=1 // pred_check_branch
      %12 = sbr.rel (0) target = $region5
    $region4: #{tpu_custom_call.1} parent=1 // pred_region
      %s14 = ssub.s32 8192, 8192
      %15 = vsyncadd [#allocation3], %s14
      %s16 = sshll.u32 [#allocation2], 4
      %s17 = int_to_ptr.vmem [resolvable:$true] %s16
      %22 = dma.hbm_to_vmem [thread:$0]  %s0, 8192, %s17, [#allocation3], 128, 128, 8
    $region5: #{tpu_custom_call.1} parent=1 // pred_fallthru
      _
    // Predicated region
    $region6: #{tpu_custom_call.1} parent=1 // pred_check
      _
    $region7: #{tpu_custom_call.1} parent=1 // pred_check_branch
      %24 = sbr.rel (0) target = $region9
    $region8: #{tpu_custom_call.1} parent=1 // pred_region
      %s26 = ssub.s32 2048, 2048
      %27 = vsyncadd [#allocation6], %s26
      %s28 = sshll.u32 [#allocation5], 4
      %s29 = int_to_ptr.vmem [resolvable:$true] %s28
      %34 = dma.hbm_to_vmem [thread:$0]  %s1, 2048, %s29, [#allocation6], 128, 128, 8
    $region9: #{tpu_custom_call.1} parent=1 // pred_fallthru
      _
    // Predicated region
    $region10: #{tpu_custom_call.1} parent=1 // pred_check
      _
    $region11: #{tpu_custom_call.1} parent=1 // pred_check_branch
      %36 = sbr.rel (0) target = $region13
    $region12: #{tpu_custom_call.1} parent=1 // pred_region
      _
    $region13: #{tpu_custom_call.1} parent=1 // pred_fallthru
      _
    // Predicated region
    $region14: #{tpu_custom_call.1} parent=1 // pred_check
      _
    $region15: #{tpu_custom_call.1} parent=1 // pred_check_branch
      %38 = sbr.rel (0) target = $region17
    $region16: #{tpu_custom_call.1} parent=1 // pred_region
      %39 = dma.done [#allocation3], 8192
    $region17: #{tpu_custom_call.1} parent=1 // pred_fallthru
      _
    // Predicated region
    $region18: #{tpu_custom_call.1} parent=1 // pred_check
      _
    $region19: #{tpu_custom_call.1} parent=1 // pred_check_branch
      %41 = sbr.rel (0) target = $region21
    $region20: #{tpu_custom_call.1} parent=1 // pred_region
      %42 = dma.done [#allocation6], 2048
    $region21: #{tpu_custom_call.1} parent=1 // pred_fallthru
      _
    %v43 = vld [vmem:[#allocation2] sm:$0xff]
    %v44 = vld [vmem:[#allocation2 + $0x8] sm:$0xff]
    %v45 = vld [vmem:[#allocation2 + $0x10] sm:$0xff]
    %v46 = vld [vmem:[#allocation2 + $0x18] sm:$0xff]
    %v47 = vld [vmem:[#allocation2 + $0x20] sm:$0xff]
    %v48 = vld [vmem:[#allocation2 + $0x28] sm:$0xff]
    %v49 = vld [vmem:[#allocation2 + $0x30] sm:$0xff]
    %v50 = vld [vmem:[#allocation2 + $0x38] sm:$0xff]
    %v51 = vld [vmem:[#allocation2 + $0x40] sm:$0xff]
    %v52 = vld [vmem:[#allocation2 + $0x48] sm:$0xff]
    %v53 = vld [vmem:[#allocation2 + $0x50] sm:$0xff]
    %v54 = vld [vmem:[#allocation2 + $0x58] sm:$0xff]
    %v55 = vld [vmem:[#allocation2 + $0x60] sm:$0xff]
    %v56 = vld [vmem:[#allocation2 + $0x68] sm:$0xff]
    %v57 = vld [vmem:[#allocation2 + $0x70] sm:$0xff]
    %v58 = vld [vmem:[#allocation2 + $0x78] sm:$0xff]
    %v59 = vld [vmem:[#allocation2 + $0x80] sm:$0xff]
    %v60 = vld [vmem:[#allocation2 + $0x88] sm:$0xff]
    %v61 = vld [vmem:[#allocation2 + $0x90] sm:$0xff]
    %v62 = vld [vmem:[#allocation2 + $0x98] sm:$0xff]
    %v63 = vld [vmem:[#allocation2 + $0xa0] sm:$0xff]
    %v64 = vld [vmem:[#allocation2 + $0xa8] sm:$0xff]
    %v65 = vld [vmem:[#allocation2 + $0xb0] sm:$0xff]
    %v66 = vld [vmem:[#allocation2 + $0xb8] sm:$0xff]
    %v67 = vld [vmem:[#allocation2 + $0xc0] sm:$0xff]
    %v68 = vld [vmem:[#allocation2 + $0xc8] sm:$0xff]
    %v69 = vld [vmem:[#allocation2 + $0xd0] sm:$0xff]
    %v70 = vld [vmem:[#allocation2 + $0xd8] sm:$0xff]
    %v71 = vld [vmem:[#allocation2 + $0xe0] sm:$0xff]
    %v72 = vld [vmem:[#allocation2 + $0xe8] sm:$0xff]
    %v73 = vld [vmem:[#allocation2 + $0xf0] sm:$0xff]
    %v74 = vld [vmem:[#allocation2 + $0xf8] sm:$0xff]
    %v75 = vld [vmem:[#allocation2 + $0x100] sm:$0xff]
    %v76 = vld [vmem:[#allocation2 + $0x108] sm:$0xff]
    %v77 = vld [vmem:[#allocation2 + $0x110] sm:$0xff]
    %v78 = vld [vmem:[#allocation2 + $0x118] sm:$0xff]
    %v79 = vld [vmem:[#allocation2 + $0x120] sm:$0xff]
    %v80 = vld [vmem:[#allocation2 + $0x128] sm:$0xff]
    %v81 = vld [vmem:[#allocation2 + $0x130] sm:$0xff]
    %v82 = vld [vmem:[#allocation2 + $0x138] sm:$0xff]
    %v83 = vld [vmem:[#allocation2 + $0x140] sm:$0xff]
    %v84 = vld [vmem:[#allocation2 + $0x148] sm:$0xff]
    %v85 = vld [vmem:[#allocation2 + $0x150] sm:$0xff]
    %v86 = vld [vmem:[#allocation2 + $0x158] sm:$0xff]
    %v87 = vld [vmem:[#allocation2 + $0x160] sm:$0xff]
    %v88 = vld [vmem:[#allocation2 + $0x168] sm:$0xff]
    %v89 = vld [vmem:[#allocation2 + $0x170] sm:$0xff]
    %v90 = vld [vmem:[#allocation2 + $0x178] sm:$0xff]
    %v91 = vld [vmem:[#allocation2 + $0x180] sm:$0xff]
    %v92 = vld [vmem:[#allocation2 + $0x188] sm:$0xff]
    %v93 = vld [vmem:[#allocation2 + $0x190] sm:$0xff]
    %v94 = vld [vmem:[#allocation2 + $0x198] sm:$0xff]
    %v95 = vld [vmem:[#allocation2 + $0x1a0] sm:$0xff]
    %v96 = vld [vmem:[#allocation2 + $0x1a8] sm:$0xff]
    %v97 = vld [vmem:[#allocation2 + $0x1b0] sm:$0xff]
    %v98 = vld [vmem:[#allocation2 + $0x1b8] sm:$0xff]
    %v99 = vld [vmem:[#allocation2 + $0x1c0] sm:$0xff]
    %v100 = vld [vmem:[#allocation2 + $0x1c8] sm:$0xff]
    %v101 = vld [vmem:[#allocation2 + $0x1d0] sm:$0xff]
    %v102 = vld [vmem:[#allocation2 + $0x1d8] sm:$0xff]
    %v103 = vld [vmem:[#allocation2 + $0x1e0] sm:$0xff]
    %v104 = vld [vmem:[#allocation2 + $0x1e8] sm:$0xff]
    %v105 = vld [vmem:[#allocation2 + $0x1f0] sm:$0xff]
    %v106 = vld [vmem:[#allocation2 + $0x1f8] sm:$0xff]
    %v107 = vld [vmem:[#allocation5] sm:$0xff]
    %v108 = vld [vmem:[#allocation5 + $0x8] sm:$0xff]
    %v109 = vld [vmem:[#allocation5 + $0x10] sm:$0xff]
    %v110 = vld [vmem:[#allocation5 + $0x18] sm:$0xff]
    %v111 = vld [vmem:[#allocation5 + $0x20] sm:$0xff]
    %v112 = vld [vmem:[#allocation5 + $0x28] sm:$0xff]
    %v113 = vld [vmem:[#allocation5 + $0x30] sm:$0xff]
    %v114 = vld [vmem:[#allocation5 + $0x38] sm:$0xff]
    %v115 = vld [vmem:[#allocation5 + $0x40] sm:$0xff]
    %v116 = vld [vmem:[#allocation5 + $0x48] sm:$0xff]
    %v117 = vld [vmem:[#allocation5 + $0x50] sm:$0xff]
    %v118 = vld [vmem:[#allocation5 + $0x58] sm:$0xff]
    %v119 = vld [vmem:[#allocation5 + $0x60] sm:$0xff]
    %v120 = vld [vmem:[#allocation5 + $0x68] sm:$0xff]
    %v121 = vld [vmem:[#allocation5 + $0x70] sm:$0xff]
    %v122 = vld [vmem:[#allocation5 + $0x78] sm:$0xff]
    %123 = vmatprep.subr.mxu0 0.0
    %124 = vmatpush1.msra.mxu0 %v107
    %125 = vmatprep.subr.mxu0 0.0
    %126 = vmatpush1.msra.mxu0 %v108
    %127 = vmatprep.subr.mxu0 0.0
    %128 = vmatpush1.msra.mxu0 %v109
    %129 = vmatprep.subr.mxu0 0.0
    %130 = vmatpush1.msra.mxu0 %v110
    %131 = vmatprep.subr.mxu0 0.0
    %132 = vmatpush1.msra.mxu0 %v111
    %133 = vmatprep.subr.mxu0 0.0
    %134 = vmatpush1.msra.mxu0 %v112
    %135 = vmatprep.subr.mxu0 0.0
    %136 = vmatpush1.msra.mxu0 %v113
    %137 = vmatprep.subr.mxu0 0.0
    %138 = vmatpush1.msra.mxu0 %v114
    %139 = vmatprep.subr.mxu0 0.0
    %140 = vmatpush1.msra.mxu0 %v115
    %141 = vmatprep.subr.mxu0 0.0
    %142 = vmatpush1.msra.mxu0 %v116
    %143 = vmatprep.subr.mxu0 0.0
    %144 = vmatpush1.msra.mxu0 %v117
    %145 = vmatprep.subr.mxu0 0.0
    %146 = vmatpush1.msra.mxu0 %v118
    %147 = vmatprep.subr.mxu0 0.0
    %148 = vmatpush1.msra.mxu0 %v119
    %149 = vmatprep.subr.mxu0 0.0
    %150 = vmatpush1.msra.mxu0 %v120
    %151 = vmatprep.subr.mxu0 0.0
    %152 = vmatpush1.msra.mxu0 %v121
    %153 = vmatprep.subr.mxu0 0.0
    %154 = vmatpush1.msra.mxu0 %v122
    %155 = vmatprep.subr.mxu0 0.0
    %156 = vmatpush1.msra.mxu0 0.0
    %157 = vmatprep.subr.mxu0 0.0
    %158 = vmatpush1.msra.mxu0 0.0
    %159 = vmatprep.subr.mxu0 0.0
    %160 = vmatpush1.msra.mxu0 0.0
    %161 = vmatprep.subr.mxu0 0.0
    %162 = vmatpush1.msra.mxu0 0.0
    %163 = vmatprep.subr.mxu0 0.0
    %164 = vmatpush1.msra.mxu0 0.0
    %165 = vmatprep.subr.mxu0 0.0
    %166 = vmatpush1.msra.mxu0 0.0
    %167 = vmatprep.subr.mxu0 0.0
    %168 = vmatpush1.msra.mxu0 0.0
    %169 = vmatprep.subr.mxu0 0.0
    %170 = vmatpush1.msra.mxu0 0.0
    %171 = vmatprep.subr.mxu0 0.0
    %172 = vmatpush1.msra.mxu0 0.0
    %173 = vmatprep.subr.mxu0 0.0
    %174 = vmatpush1.msra.mxu0 0.0
    %175 = vmatprep.subr.mxu0 0.0
    %176 = vmatpush1.msra.mxu0 0.0
    %177 = vmatprep.subr.mxu0 0.0
    %178 = vmatpush1.msra.mxu0 0.0
    %179 = vmatprep.subr.mxu0 0.0
    %180 = vmatpush1.msra.mxu0 0.0
    %181 = vmatprep.subr.mxu0 0.0
    %182 = vmatpush1.msra.mxu0 0.0
    %183 = vmatprep.subr.mxu0 0.0
    %184 = vmatpush1.msra.mxu0 0.0
    %185 = vmatprep.subr.mxu0 0.0
    %186 = vmatpush1.msra.mxu0 0.0
    %187 = vmatprep.mubr.f32.mxu0 0.0
    %188 = vmatmul.mubr.f32.gmra.mrb[0].mxu0 %v43
    %v189 = vpop.f32.mrb[0].mxu0
    %v190 = vadd.f32 0.0, %v189
    %v191 = vpop.f32.mrb[0].mxu0
    %192 = vmatprep.mubr.f32.mxu0 0.0
    %193 = vmatmul.mubr.f32.gmra.mrb[0].mxu0 %v44
    %v194 = vpop.f32.mrb[0].mxu0
    %v195 = vadd.f32 0.0, %v194
    %v196 = vpop.f32.mrb[0].mxu0
    %197 = vmatprep.mubr.f32.mxu0 0.0
    %198 = vmatmul.mubr.f32.gmra.mrb[0].mxu0 %v45
    %v199 = vpop.f32.mrb[0].mxu0
    %v200 = vadd.f32 0.0, %v199
    %v201 = vpop.f32.mrb[0].mxu0
    %202 = vmatprep.mubr.f32.mxu0 0.0
    %203 = vmatmul.mubr.f32.gmra.mrb[0].mxu0 %v46
    %v204 = vpop.f32.mrb[0].mxu0
    %v205 = vadd.f32 0.0, %v204
    %v206 = vpop.f32.mrb[0].mxu0
    %207 = vmatprep.mubr.f32.mxu0 0.0
    %208 = vmatmul.mubr.f32.gmra.mrb[0].mxu0 %v47
    %v209 = vpop.f32.mrb[0].mxu0
    %v210 = vadd.f32 0.0, %v209
    %v211 = vpop.f32.mrb[0].mxu0
    %212 = vmatprep.mubr.f32.mxu0 0.0
    %213 = vmatmul.mubr.f32.gmra.mrb[0].mxu0 %v48
    %v214 = vpop.f32.mrb[0].mxu0
    %v215 = vadd.f32 0.0, %v214
    %v216 = vpop.f32.mrb[0].mxu0
    %217 = vmatprep.mubr.f32.mxu0 0.0
    %218 = vmatmul.mubr.f32.gmra.mrb[0].mxu0 %v49
    %v219 = vpop.f32.mrb[0].mxu0
    %v220 = vadd.f32 0.0, %v219
    %v221 = vpop.f32.mrb[0].mxu0
    %222 = vmatprep.mubr.f32.mxu0 0.0
    %223 = vmatmul.mubr.f32.gmra.mrb[0].mxu0 %v50
    %v224 = vpop.f32.mrb[0].mxu0
    %v225 = vadd.f32 0.0, %v224
    %v226 = vpop.f32.mrb[0].mxu0
    %227 = vmatprep.mubr.f32.mxu0 0.0
    %228 = vmatmul.mubr.f32.gmra.mrb[0].mxu0 %v51
    %v229 = vpop.f32.mrb[0].mxu0
    %v230 = vadd.f32 0.0, %v229
    %v231 = vpop.f32.mrb[0].mxu0
    %232 = vmatprep.mubr.f32.mxu0 0.0
    %233 = vmatmul.mubr.f32.gmra.mrb[0].mxu0 %v52
    %v234 = vpop.f32.mrb[0].mxu0
    %v235 = vadd.f32 0.0, %v234
    %v236 = vpop.f32.mrb[0].mxu0
    %237 = vmatprep.mubr.f32.mxu0 0.0
    %238 = vmatmul.mubr.f32.gmra.mrb[0].mxu0 %v53
    %v239 = vpop.f32.mrb[0].mxu0
    %v240 = vadd.f32 0.0, %v239
    %v241 = vpop.f32.mrb[0].mxu0
    %242 = vmatprep.mubr.f32.mxu0 0.0
    %243 = vmatmul.mubr.f32.gmra.mrb[0].mxu0 %v54
    %v244 = vpop.f32.mrb[0].mxu0
    %v245 = vadd.f32 0.0, %v244
    %v246 = vpop.f32.mrb[0].mxu0
    %247 = vmatprep.mubr.f32.mxu0 0.0
    %248 = vmatmul.mubr.f32.gmra.mrb[0].mxu0 %v55
    %v249 = vpop.f32.mrb[0].mxu0
    %v250 = vadd.f32 0.0, %v249
    %v251 = vpop.f32.mrb[0].mxu0
    %252 = vmatprep.mubr.f32.mxu0 0.0
    %253 = vmatmul.mubr.f32.gmra.mrb[0].mxu0 %v56
    %v254 = vpop.f32.mrb[0].mxu0
    %v255 = vadd.f32 0.0, %v254
    %v256 = vpop.f32.mrb[0].mxu0
    %257 = vmatprep.mubr.f32.mxu0 0.0
    %258 = vmatmul.mubr.f32.gmra.mrb[0].mxu0 %v57
    %v259 = vpop.f32.mrb[0].mxu0
    %v260 = vadd.f32 0.0, %v259
    %v261 = vpop.f32.mrb[0].mxu0
    %262 = vmatprep.mubr.f32.mxu0 0.0
    %263 = vmatmul.mubr.f32.gmra.mrb[0].mxu0 %v58
    %v264 = vpop.f32.mrb[0].mxu0
    %v265 = vadd.f32 0.0, %v264
    %v266 = vpop.f32.mrb[0].mxu0
    %267 = vmatprep.mubr.f32.mxu0 0.0
    %268 = vmatmul.mubr.f32.gmra.mrb[0].mxu0 %v59
    %v269 = vpop.f32.mrb[0].mxu0
    %v270 = vadd.f32 0.0, %v269
    %v271 = vpop.f32.mrb[0].mxu0
    %272 = vmatprep.mubr.f32.mxu0 0.0
    %273 = vmatmul.mubr.f32.gmra.mrb[0].mxu0 %v60
    %v274 = vpop.f32.mrb[0].mxu0
    %v275 = vadd.f32 0.0, %v274
    %v276 = vpop.f32.mrb[0].mxu0
    %277 = vmatprep.mubr.f32.mxu0 0.0
    %278 = vmatmul.mubr.f32.gmra.mrb[0].mxu0 %v61
    %v279 = vpop.f32.mrb[0].mxu0
    %v280 = vadd.f32 0.0, %v279
    %v281 = vpop.f32.mrb[0].mxu0
    %282 = vmatprep.mubr.f32.mxu0 0.0
    %283 = vmatmul.mubr.f32.gmra.mrb[0].mxu0 %v62
    %v284 = vpop.f32.mrb[0].mxu0
    %v285 = vadd.f32 0.0, %v284
    %v286 = vpop.f32.mrb[0].mxu0
    %287 = vmatprep.mubr.f32.mxu0 0.0
    %288 = vmatmul.mubr.f32.gmra.mrb[0].mxu0 %v63
    %v289 = vpop.f32.mrb[0].mxu0
    %v290 = vadd.f32 0.0, %v289
    %v291 = vpop.f32.mrb[0].mxu0
    %292 = vmatprep.mubr.f32.mxu0 0.0
    %293 = vmatmul.mubr.f32.gmra.mrb[0].mxu0 %v64
    %v294 = vpop.f32.mrb[0].mxu0
    %v295 = vadd.f32 0.0, %v294
    %v296 = vpop.f32.mrb[0].mxu0
    %297 = vmatprep.mubr.f32.mxu0 0.0
    %298 = vmatmul.mubr.f32.gmra.mrb[0].mxu0 %v65
    %v299 = vpop.f32.mrb[0].mxu0
    %v300 = vadd.f32 0.0, %v299
    %v301 = vpop.f32.mrb[0].mxu0
    %302 = vmatprep.mubr.f32.mxu0 0.0
    %303 = vmatmul.mubr.f32.gmra.mrb[0].mxu0 %v66
    %v304 = vpop.f32.mrb[0].mxu0
    %v305 = vadd.f32 0.0, %v304
    %v306 = vpop.f32.mrb[0].mxu0
    %307 = vmatprep.mubr.f32.mxu0 0.0
    %308 = vmatmul.mubr.f32.gmra.mrb[0].mxu0 %v67
    %v309 = vpop.f32.mrb[0].mxu0
    %v310 = vadd.f32 0.0, %v309
    %v311 = vpop.f32.mrb[0].mxu0
    %312 = vmatprep.mubr.f32.mxu0 0.0
    %313 = vmatmul.mubr.f32.gmra.mrb[0].mxu0 %v68
    %v314 = vpop.f32.mrb[0].mxu0
    %v315 = vadd.f32 0.0, %v314
    %v316 = vpop.f32.mrb[0].mxu0
    %317 = vmatprep.mubr.f32.mxu0 0.0
    %318 = vmatmul.mubr.f32.gmra.mrb[0].mxu0 %v69
    %v319 = vpop.f32.mrb[0].mxu0
    %v320 = vadd.f32 0.0, %v319
    %v321 = vpop.f32.mrb[0].mxu0
    %322 = vmatprep.mubr.f32.mxu0 0.0
    %323 = vmatmul.mubr.f32.gmra.mrb[0].mxu0 %v70
    %v324 = vpop.f32.mrb[0].mxu0
    %v325 = vadd.f32 0.0, %v324
    %v326 = vpop.f32.mrb[0].mxu0
    %327 = vmatprep.mubr.f32.mxu0 0.0
    %328 = vmatmul.mubr.f32.gmra.mrb[0].mxu0 %v71
    %v329 = vpop.f32.mrb[0].mxu0
    %v330 = vadd.f32 0.0, %v329
    %v331 = vpop.f32.mrb[0].mxu0
    %332 = vmatprep.mubr.f32.mxu0 0.0
    %333 = vmatmul.mubr.f32.gmra.mrb[0].mxu0 %v72
    %v334 = vpop.f32.mrb[0].mxu0
    %v335 = vadd.f32 0.0, %v334
    %v336 = vpop.f32.mrb[0].mxu0
    %337 = vmatprep.mubr.f32.mxu0 0.0
    %338 = vmatmul.mubr.f32.gmra.mrb[0].mxu0 %v73
    %v339 = vpop.f32.mrb[0].mxu0
    %v340 = vadd.f32 0.0, %v339
    %v341 = vpop.f32.mrb[0].mxu0
    %342 = vmatprep.mubr.f32.mxu0 0.0
    %343 = vmatmul.mubr.f32.gmra.mrb[0].mxu0 %v74
    %v344 = vpop.f32.mrb[0].mxu0
    %v345 = vadd.f32 0.0, %v344
    %v346 = vpop.f32.mrb[0].mxu0
    %347 = vmatprep.mubr.f32.mxu0 0.0
    %348 = vmatmul.mubr.f32.gmra.mrb[0].mxu0 %v75
    %v349 = vpop.f32.mrb[0].mxu0
    %v350 = vadd.f32 0.0, %v349
    %v351 = vpop.f32.mrb[0].mxu0
    %352 = vmatprep.mubr.f32.mxu0 0.0
    %353 = vmatmul.mubr.f32.gmra.mrb[0].mxu0 %v76
    %v354 = vpop.f32.mrb[0].mxu0
    %v355 = vadd.f32 0.0, %v354
    %v356 = vpop.f32.mrb[0].mxu0
    %357 = vmatprep.mubr.f32.mxu0 0.0
    %358 = vmatmul.mubr.f32.gmra.mrb[0].mxu0 %v77
    %v359 = vpop.f32.mrb[0].mxu0
    %v360 = vadd.f32 0.0, %v359
    %v361 = vpop.f32.mrb[0].mxu0
    %362 = vmatprep.mubr.f32.mxu0 0.0
    %363 = vmatmul.mubr.f32.gmra.mrb[0].mxu0 %v78
    %v364 = vpop.f32.mrb[0].mxu0
    %v365 = vadd.f32 0.0, %v364
    %v366 = vpop.f32.mrb[0].mxu0
    %367 = vmatprep.mubr.f32.mxu0 0.0
    %368 = vmatmul.mubr.f32.gmra.mrb[0].mxu0 %v79
    %v369 = vpop.f32.mrb[0].mxu0
    %v370 = vadd.f32 0.0, %v369
    %v371 = vpop.f32.mrb[0].mxu0
    %372 = vmatprep.mubr.f32.mxu0 0.0
    %373 = vmatmul.mubr.f32.gmra.mrb[0].mxu0 %v80
    %v374 = vpop.f32.mrb[0].mxu0
    %v375 = vadd.f32 0.0, %v374
    %v376 = vpop.f32.mrb[0].mxu0
    %377 = vmatprep.mubr.f32.mxu0 0.0
    %378 = vmatmul.mubr.f32.gmra.mrb[0].mxu0 %v81
    %v379 = vpop.f32.mrb[0].mxu0
    %v380 = vadd.f32 0.0, %v379
    %v381 = vpop.f32.mrb[0].mxu0
    %382 = vmatprep.mubr.f32.mxu0 0.0
    %383 = vmatmul.mubr.f32.gmra.mrb[0].mxu0 %v82
    %v384 = vpop.f32.mrb[0].mxu0
    %v385 = vadd.f32 0.0, %v384
    %v386 = vpop.f32.mrb[0].mxu0
    %387 = vmatprep.mubr.f32.mxu0 0.0
    %388 = vmatmul.mubr.f32.gmra.mrb[0].mxu0 %v83
    %v389 = vpop.f32.mrb[0].mxu0
    %v390 = vadd.f32 0.0, %v389
    %v391 = vpop.f32.mrb[0].mxu0
    %392 = vmatprep.mubr.f32.mxu0 0.0
    %393 = vmatmul.mubr.f32.gmra.mrb[0].mxu0 %v84
    %v394 = vpop.f32.mrb[0].mxu0
    %v395 = vadd.f32 0.0, %v394
    %v396 = vpop.f32.mrb[0].mxu0
    %397 = vmatprep.mubr.f32.mxu0 0.0
    %398 = vmatmul.mubr.f32.gmra.mrb[0].mxu0 %v85
    %v399 = vpop.f32.mrb[0].mxu0
    %v400 = vadd.f32 0.0, %v399
    %v401 = vpop.f32.mrb[0].mxu0
    %402 = vmatprep.mubr.f32.mxu0 0.0
    %403 = vmatmul.mubr.f32.gmra.mrb[0].mxu0 %v86
    %v404 = vpop.f32.mrb[0].mxu0
    %v405 = vadd.f32 0.0, %v404
    %v406 = vpop.f32.mrb[0].mxu0
    %407 = vmatprep.mubr.f32.mxu0 0.0
    %408 = vmatmul.mubr.f32.gmra.mrb[0].mxu0 %v87
    %v409 = vpop.f32.mrb[0].mxu0
    %v410 = vadd.f32 0.0, %v409
    %v411 = vpop.f32.mrb[0].mxu0
    %412 = vmatprep.mubr.f32.mxu0 0.0
    %413 = vmatmul.mubr.f32.gmra.mrb[0].mxu0 %v88
    %v414 = vpop.f32.mrb[0].mxu0
    %v415 = vadd.f32 0.0, %v414
    %v416 = vpop.f32.mrb[0].mxu0
    %417 = vmatprep.mubr.f32.mxu0 0.0
    %418 = vmatmul.mubr.f32.gmra.mrb[0].mxu0 %v89
    %v419 = vpop.f32.mrb[0].mxu0
    %v420 = vadd.f32 0.0, %v419
    %v421 = vpop.f32.mrb[0].mxu0
    %422 = vmatprep.mubr.f32.mxu0 0.0
    %423 = vmatmul.mubr.f32.gmra.mrb[0].mxu0 %v90
    %v424 = vpop.f32.mrb[0].mxu0
    %v425 = vadd.f32 0.0, %v424
    %v426 = vpop.f32.mrb[0].mxu0
    %427 = vmatprep.mubr.f32.mxu0 0.0
    %428 = vmatmul.mubr.f32.gmra.mrb[0].mxu0 %v91
    %v429 = vpop.f32.mrb[0].mxu0
    %v430 = vadd.f32 0.0, %v429
    %v431 = vpop.f32.mrb[0].mxu0
    %432 = vmatprep.mubr.f32.mxu0 0.0
    %433 = vmatmul.mubr.f32.gmra.mrb[0].mxu0 %v92
    %v434 = vpop.f32.mrb[0].mxu0
    %v435 = vadd.f32 0.0, %v434
    %v436 = vpop.f32.mrb[0].mxu0
    %437 = vmatprep.mubr.f32.mxu0 0.0
    %438 = vmatmul.mubr.f32.gmra.mrb[0].mxu0 %v93
    %v439 = vpop.f32.mrb[0].mxu0
    %v440 = vadd.f32 0.0, %v439
    %v441 = vpop.f32.mrb[0].mxu0
    %442 = vmatprep.mubr.f32.mxu0 0.0
    %443 = vmatmul.mubr.f32.gmra.mrb[0].mxu0 %v94
    %v444 = vpop.f32.mrb[0].mxu0
    %v445 = vadd.f32 0.0, %v444
    %v446 = vpop.f32.mrb[0].mxu0
    %447 = vmatprep.mubr.f32.mxu0 0.0
    %448 = vmatmul.mubr.f32.gmra.mrb[0].mxu0 %v95
    %v449 = vpop.f32.mrb[0].mxu0
    %v450 = vadd.f32 0.0, %v449
    %v451 = vpop.f32.mrb[0].mxu0
    %452 = vmatprep.mubr.f32.mxu0 0.0
    %453 = vmatmul.mubr.f32.gmra.mrb[0].mxu0 %v96
    %v454 = vpop.f32.mrb[0].mxu0
    %v455 = vadd.f32 0.0, %v454
    %v456 = vpop.f32.mrb[0].mxu0
    %457 = vmatprep.mubr.f32.mxu0 0.0
    %458 = vmatmul.mubr.f32.gmra.mrb[0].mxu0 %v97
    %v459 = vpop.f32.mrb[0].mxu0
    %v460 = vadd.f32 0.0, %v459
    %v461 = vpop.f32.mrb[0].mxu0
    %462 = vmatprep.mubr.f32.mxu0 0.0
    %463 = vmatmul.mubr.f32.gmra.mrb[0].mxu0 %v98
    %v464 = vpop.f32.mrb[0].mxu0
    %v465 = vadd.f32 0.0, %v464
    %v466 = vpop.f32.mrb[0].mxu0
    %467 = vmatprep.mubr.f32.mxu0 0.0
    %468 = vmatmul.mubr.f32.gmra.mrb[0].mxu0 %v99
    %v469 = vpop.f32.mrb[0].mxu0
    %v470 = vadd.f32 0.0, %v469
    %v471 = vpop.f32.mrb[0].mxu0
    %472 = vmatprep.mubr.f32.mxu0 0.0
    %473 = vmatmul.mubr.f32.gmra.mrb[0].mxu0 %v100
    %v474 = vpop.f32.mrb[0].mxu0
    %v475 = vadd.f32 0.0, %v474
    %v476 = vpop.f32.mrb[0].mxu0
    %477 = vmatprep.mubr.f32.mxu0 0.0
    %478 = vmatmul.mubr.f32.gmra.mrb[0].mxu0 %v101
    %v479 = vpop.f32.mrb[0].mxu0
    %v480 = vadd.f32 0.0, %v479
    %v481 = vpop.f32.mrb[0].mxu0
    %482 = vmatprep.mubr.f32.mxu0 0.0
    %483 = vmatmul.mubr.f32.gmra.mrb[0].mxu0 %v102
    %v484 = vpop.f32.mrb[0].mxu0
    %v485 = vadd.f32 0.0, %v484
    %v486 = vpop.f32.mrb[0].mxu0
    %487 = vmatprep.mubr.f32.mxu0 0.0
    %488 = vmatmul.mubr.f32.gmra.mrb[0].mxu0 %v103
    %v489 = vpop.f32.mrb[0].mxu0
    %v490 = vadd.f32 0.0, %v489
    %v491 = vpop.f32.mrb[0].mxu0
    %492 = vmatprep.mubr.f32.mxu0 0.0
    %493 = vmatmul.mubr.f32.gmra.mrb[0].mxu0 %v104
    %v494 = vpop.f32.mrb[0].mxu0
    %v495 = vadd.f32 0.0, %v494
    %v496 = vpop.f32.mrb[0].mxu0
    %497 = vmatprep.mubr.f32.mxu0 0.0
    %498 = vmatmul.mubr.f32.gmra.mrb[0].mxu0 %v105
    %v499 = vpop.f32.mrb[0].mxu0
    %v500 = vadd.f32 0.0, %v499
    %v501 = vpop.f32.mrb[0].mxu0
    %502 = vmatprep.mubr.f32.mxu0 0.0
    %503 = vmatmul.mubr.f32.gmra.mrb[0].mxu0 %v106
    %v504 = vpop.f32.mrb[0].mxu0
    %v505 = vadd.f32 0.0, %v504
    %v506 = vpop.f32.mrb[0].mxu0
    %507 = vdwg.mxu0
    %v508 = vmax.f32 %v190, %v210
    %v509 = vmax.f32 %v195, %v215
    %v510 = vmax.f32 %v200, %v220
    %v511 = vmax.f32 %v205, %v225
    %v512 = vmax.f32 %v508, %v230
    %v513 = vmax.f32 %v509, %v235
    %v514 = vmax.f32 %v510, %v240
    %v515 = vmax.f32 %v511, %v245
    %v516 = vmax.f32 %v512, %v250
    %v517 = vmax.f32 %v513, %v255
    %v518 = vmax.f32 %v514, %v260
    %v519 = vmax.f32 %v515, %v265
    %v520 = vmax.f32 %v516, %v270
    %v521 = vmax.f32 %v517, %v275
    %v522 = vmax.f32 %v518, %v280
    %v523 = vmax.f32 %v519, %v285
    %v524 = vmax.f32 %v520, %v290
    %v525 = vmax.f32 %v521, %v295
    %v526 = vmax.f32 %v522, %v300
    %v527 = vmax.f32 %v523, %v305
    %v528 = vmax.f32 %v524, %v310
    %v529 = vmax.f32 %v525, %v315
    %v530 = vmax.f32 %v526, %v320
    %v531 = vmax.f32 %v527, %v325
    %v532 = vmax.f32 %v528, %v330
    %v533 = vmax.f32 %v529, %v335
    %v534 = vmax.f32 %v530, %v340
    %v535 = vmax.f32 %v531, %v345
    %v536 = vmax.f32 %v532, %v533
    %v537 = vmax.f32 %v534, %v535
    %v538 = vmax.f32 %v536, %v537
    %v539 = vrot.slane %v538, 4
    %v540 = vmax.f32 %v538, %v539
    %v541 = vrot.slane %v540, 2
    %v542 = vmax.f32 %v540, %v541
    %v543 = vrot.slane %v542, 1
    %v544 = vmax.f32 %v542, %v543
    %v545 = vld [vmem:[%s2] sm:$0x1]
    %v546 = vadd.f32 %v544, %v545
    %v547 = vmax.f32 %v546, 0.0
    %548 = vst [vmem:[#allocation7] sm:$0x1] %v547
    %v549 = vmax.f32 %v350, %v370
    %v550 = vmax.f32 %v355, %v375
    %v551 = vmax.f32 %v360, %v380
    %v552 = vmax.f32 %v365, %v385
    %v553 = vmax.f32 %v549, %v390
    %v554 = vmax.f32 %v550, %v395
    %v555 = vmax.f32 %v551, %v400
    %v556 = vmax.f32 %v552, %v405
    %v557 = vmax.f32 %v553, %v410
    %v558 = vmax.f32 %v554, %v415
    %v559 = vmax.f32 %v555, %v420
    %v560 = vmax.f32 %v556, %v425
    %v561 = vmax.f32 %v557, %v430
    %v562 = vmax.f32 %v558, %v435
    %v563 = vmax.f32 %v559, %v440
    %v564 = vmax.f32 %v560, %v445
    %v565 = vmax.f32 %v561, %v450
    %v566 = vmax.f32 %v562, %v455
    %v567 = vmax.f32 %v563, %v460
    %v568 = vmax.f32 %v564, %v465
    %v569 = vmax.f32 %v565, %v470
    %v570 = vmax.f32 %v566, %v475
    %v571 = vmax.f32 %v567, %v480
    %v572 = vmax.f32 %v568, %v485
    %v573 = vmax.f32 %v569, %v490
    %v574 = vmax.f32 %v570, %v495
    %v575 = vmax.f32 %v571, %v500
    %v576 = vmax.f32 %v572, %v505
    %v577 = vmax.f32 %v573, %v574
    %v578 = vmax.f32 %v575, %v576
    %v579 = vmax.f32 %v577, %v578
    %v580 = vrot.slane %v579, 4
    %v581 = vmax.f32 %v579, %v580
    %v582 = vrot.slane %v581, 2
    %v583 = vmax.f32 %v581, %v582
    %v584 = vrot.slane %v583, 1
    %v585 = vmax.f32 %v583, %v584
    %v586 = vld [vmem:[%s2] sm:$0x1]
    %v587 = vadd.f32 %v585, %v586
    %v588 = vmax.f32 %v587, 0.0
    %589 = vst [vmem:[#allocation7 + $0x1] sm:$0x1] %v588
    // Predicated region
    $region22: #{tpu_custom_call.1} parent=1 // pred_check
      _
    $region23: #{tpu_custom_call.1} parent=1 // pred_check_branch
      %591 = sbr.rel (0) target = $region25
    $region24: #{tpu_custom_call.1} parent=1 // pred_region
      %s593 = ssub.s32 32, 32
      %594 = vsyncadd [#allocation4], %s593
      %s596 = sshll.u32 [#allocation7], 4
      %s597 = int_to_ptr.vmem [resolvable:$true] %s596
      %599 = dma.vmem_to_hbm [thread:$0]  %s597, 32, %s3, [#allocation4]
    $region25: #{tpu_custom_call.1} parent=1 // pred_fallthru
      _
    // Predicated region
    $region26: #{tpu_custom_call.1} parent=1 // pred_check
      _
    $region27: #{tpu_custom_call.1} parent=1 // pred_check_branch
      %601 = sbr.rel (0) target = $region29
    $region28: #{tpu_custom_call.1} parent=1 // pred_region
      %602 = dma.done [#allocation4], 32
    $region29: #{tpu_custom_call.1} parent=1 // pred_fallthru
      _
    %603 = vsyncpa [#allocation3], 1
    %604 = vsyncpa [#allocation6], 1
    %605 = vsyncpa [#allocation4], 1

</llo_original>
